<compile_context>
chip_gen: v6e
topology: v6e:2x2x1
jax: 0.10.0
libtpu: 0.0.40
codegen_flags: <defaults>
</compile_context>

<pallas_src>
import functools

import jax
import jax.numpy as jnp
from jax.experimental import pallas as pl
from jax.experimental.pallas import tpu as pltpu

HEAD_WIDTH = 128  # lane-dense padded width for the fused V/A head


def dddqn_kernel(state_ref, w1_ref, b1_ref, wh_ref, bh_ref, out_ref):
    # fc1: bf16 MXU matmul with f32 accumulation; bias + ReLU in f32 (VPU).
    x = jnp.dot(state_ref[...], w1_ref[...],
                preferred_element_type=jnp.float32)
    x = jnp.maximum(x + b1_ref[...], 0.0)
    # Fused V/A head: one [hidden, 128] matmul -> one lane-dense [B, 128] store.
    x = x.astype(wh_ref.dtype)
    out_ref[...] = jnp.dot(x, wh_ref[...],
                           preferred_element_type=jnp.float32) + bh_ref[...]


def fuse_params(w1, b1, wv, bv, wa, ba, *, matmul_dtype=jnp.bfloat16):
    """Fuse the V/A heads into one lane-dense weight/bias and cast for the MXU.

    Done once per parameter set (outside the per-step forward).
    Padded columns are exactly zero, so slicing the output is exact.
    """
    hidden = w1.shape[1]
    nactions = wa.shape[1]
    assert 1 + nactions <= HEAD_WIDTH, "fused head must fit in 128 lanes"

    wh = jnp.zeros((hidden, HEAD_WIDTH), jnp.float32)
    wh = wh.at[:, 0:1].set(wv)
    wh = wh.at[:, 1:1 + nactions].set(wa)
    bh = jnp.zeros((1, HEAD_WIDTH), jnp.float32)
    bh = bh.at[:, 0:1].set(bv)
    bh = bh.at[:, 1:1 + nactions].set(ba)

    return (w1.astype(matmul_dtype), b1.astype(jnp.float32),
            wh.astype(matmul_dtype), bh, nactions)


@functools.partial(jax.jit, static_argnames=("nactions", "block_b"))
def dddqn_forward_fused(state, w1_m, b1, wh_m, bh, *, nactions, block_b=256):
    """state: [B, idim]. Returns (V [B, 1], A [B, nactions]) in f32."""
    B, idim = state.shape
    hidden = w1_m.shape[1]
    matmul_dtype = w1_m.dtype
    op_bytes = jnp.dtype(matmul_dtype).itemsize

    state_m = state.astype(matmul_dtype)

    cost = pl.CostEstimate(
        flops=2 * B * (idim * hidden + hidden * HEAD_WIDTH),
        transcendentals=0,
        bytes_accessed=(state_m.size * op_bytes
                        + w1_m.size * op_bytes
                        + wh_m.size * op_bytes
                        + b1.size * 4 + bh.size * 4
                        + B * HEAD_WIDTH * 4),
    )

    if block_b is None or B <= block_b:
        # Tiny, latency-bound problem: single block, everything in VMEM.
        vmem = pl.BlockSpec(memory_space=pltpu.MemorySpace.VMEM)
        out = pl.pallas_call(
            dddqn_kernel,
            out_shape=jax.ShapeDtypeStruct((B, HEAD_WIDTH), jnp.float32),
            in_specs=[vmem] * 5,
            out_specs=vmem,
            cost_estimate=cost,
        )(state_m, w1_m, b1, wh_m, bh)
    else:
        # Replay-buffer sized batches: tile the batch axis, pin the weights.
        # Zero-pad to a block multiple (padded rows are sliced off below).
        pad = (-B) % block_b
        if pad:
            state_m = jnp.pad(state_m, ((0, pad), (0, 0)))
        B_pad = B + pad
        grid = (B_pad // block_b,)
        out = pl.pallas_call(
            dddqn_kernel,
            out_shape=jax.ShapeDtypeStruct((B_pad, HEAD_WIDTH), jnp.float32),
            grid=grid,
            in_specs=[
                pl.BlockSpec((block_b, idim), lambda i: (i, 0)),
                pl.BlockSpec((idim, hidden), lambda i: (0, 0)),
                pl.BlockSpec((1, hidden), lambda i: (0, 0)),
                pl.BlockSpec((hidden, HEAD_WIDTH), lambda i: (0, 0)),
                pl.BlockSpec((1, HEAD_WIDTH), lambda i: (0, 0)),
            ],
            out_specs=pl.BlockSpec((block_b, HEAD_WIDTH), lambda i: (i, 0)),
            compiler_params=pltpu.CompilerParams(
                dimension_semantics=("parallel",)),
            cost_estimate=cost,
        )(state_m, w1_m, b1, wh_m, bh)
        out = out[:B]

    V = out[:, 0:1]
    A = out[:, 1:1 + nactions]
    return V, A


def dddqn_forward(state, w1, b1, wv, bv, wa, ba, *,
                  matmul_dtype=jnp.bfloat16, block_b=256):
    """Convenience wrapper: fuse params then run the Pallas forward."""
    w1_m, b1_f, wh_m, bh, nactions = fuse_params(
        w1, b1, wv, bv, wa, ba, matmul_dtype=matmul_dtype)
    return dddqn_forward_fused(state, w1_m, b1_f, wh_m, bh,
                               nactions=nactions, block_b=block_b)


def init_params(key, idim, hidden, nactions):
    """Deterministic synthetic parameters (shapes match the torch module)."""
    k1, k2, k3, k4, k5, k6 = jax.random.split(key, 6)
    # torch Linear weight is [out, in]; we store the transpose [in, out].
    w1 = jax.random.normal(k1, (idim, hidden), jnp.float32) * 0.05
    b1 = jax.random.normal(k2, (1, hidden), jnp.float32) * 0.05
    wv = jax.random.normal(k3, (hidden, 1), jnp.float32) * 0.05
    bv = jax.random.normal(k4, (1, 1), jnp.float32) * 0.05
    wa = jax.random.normal(k5, (hidden, nactions), jnp.float32) * 0.05
    ba = jax.random.normal(k6, (1, nactions), jnp.float32) * 0.05
    return w1, b1, wv, bv, wa, ba


# TODO(synk): optimizer (Adam), MSELoss and checkpoint save/load from the
# torch module are training/IO infrastructure, not part of the forward pass.

if __name__ == "__main__":
    key = jax.random.PRNGKey(0)
    B, IDIM, HIDDEN, NACTIONS = 8, 32, 512, 4   # idim=(32,) in torch terms

    pkey, xkey = jax.random.split(key)
    params = init_params(pkey, IDIM, HIDDEN, NACTIONS)
    state = jax.random.normal(xkey, (B, IDIM), jnp.float32)

    V, A = dddqn_forward(state, *params)
    jax.block_until_ready((V, A))

    # Reference check in plain JAX (f32). bf16 matmul operands => loose tol.
    w1, b1, wv, bv, wa, ba = params
    x_ref = jnp.maximum(state @ w1 + b1, 0.0)
    V_ref = x_ref @ wv + bv
    A_ref = x_ref @ wa + ba
    assert V.shape == (B, 1) and A.shape == (B, NACTIONS)
    assert jnp.allclose(V, V_ref, atol=5e-2, rtol=5e-2)
    assert jnp.allclose(A, A_ref, atol=5e-2, rtol=5e-2)

    # Exercise the batched/grid path (parallel 256-row batch blocks) and check
    # it agrees with the single-block path on the same inputs.
    B_big = 512
    state_big = jax.random.normal(jax.random.PRNGKey(1), (B_big, IDIM),
                                  jnp.float32)
    Vg, Ag = dddqn_forward(state_big, *params, block_b=256)
    Vs, As = dddqn_forward(state_big, *params, block_b=None)
    jax.block_until_ready((Vg, Ag, Vs, As))
    assert jnp.allclose(Vg, Vs, atol=1e-6)
    assert jnp.allclose(Ag, As, atol=1e-6)

    x_big = jnp.maximum(state_big @ w1 + b1, 0.0)
    assert jnp.allclose(Vg, x_big @ wv + bv, atol=5e-2, rtol=5e-2)
    assert jnp.allclose(Ag, x_big @ wa + ba, atol=5e-2, rtol=5e-2)

    # Non-divisible batch exercises the pad-and-slice path.
    B_odd = 300
    state_odd = jax.random.normal(jax.random.PRNGKey(2), (B_odd, IDIM),
                                  jnp.float32)
    Vo, Ao = dddqn_forward(state_odd, *params, block_b=256)
    jax.block_until_ready((Vo, Ao))
    x_odd = jnp.maximum(state_odd @ w1 + b1, 0.0)
    assert Vo.shape == (B_odd, 1) and Ao.shape == (B_odd, NACTIONS)
    assert jnp.allclose(Vo, x_odd @ wv + bv, atol=5e-2, rtol=5e-2)
    assert jnp.allclose(Ao, x_odd @ wa + ba, atol=5e-2, rtol=5e-2)

    print("KERNEL_OK")
</pallas_src>

<mosaic_0001>
module attributes {stable_mosaic.version = 11 : i64} {
  func.func @dddqn_kernel(%arg0: memref<8x32xbf16, #tpu.memory_space<vmem>>, %arg1: memref<32x512xbf16, #tpu.memory_space<vmem>>, %arg2: memref<1x512xf32, #tpu.memory_space<vmem>>, %arg3: memref<512x128xbf16, #tpu.memory_space<vmem>>, %arg4: memref<1x128xf32, #tpu.memory_space<vmem>>, %arg5: memref<8x128xf32, #tpu.memory_space<vmem>>) attributes {dimension_semantics = [], scalar_prefetch = 0 : i64, scratch_operands = 0 : i64, tpu.core_type = #tpu.core_type<tc>} {
    %c0 = arith.constant 0 : index
    %c0_0 = arith.constant 0 : index
    %0 = vector.load %arg0[%c0, %c0_0] : memref<8x32xbf16, #tpu.memory_space<vmem>>, vector<8x32xbf16>
    %c0_1 = arith.constant 0 : index
    %c0_2 = arith.constant 0 : index
    %1 = vector.load %arg1[%c0_1, %c0_2] : memref<32x512xbf16, #tpu.memory_space<vmem>>, vector<32x512xbf16>
    %cst = arith.constant dense<0.000000e+00> : vector<8x512xf32>
    %2 = tpu.matmul %0, %1, %cst {dimension_numbers = #tpu.dot_dimension_numbers<[1], [0], [0], [1], [0, 0, 1, 1], [], []>} : vector<8x32xbf16>, vector<32x512xbf16>, vector<8x512xf32> -> vector<8x512xf32>
    %c0_3 = arith.constant 0 : index
    %c0_4 = arith.constant 0 : index
    %3 = vector.load %arg2[%c0_3, %c0_4] : memref<1x512xf32, #tpu.memory_space<vmem>>, vector<1x512xf32>
    %4 = vector.broadcast %3 : vector<1x512xf32> to vector<8x512xf32>
    %5 = arith.addf %2, %4 : vector<8x512xf32>
    %cst_5 = arith.constant 0.000000e+00 : f32
    %6 = vector.broadcast %cst_5 : f32 to vector<8x512xf32>
    %7 = arith.maximumf %5, %6 : vector<8x512xf32>
    %8 = arith.truncf %7 : vector<8x512xf32> to vector<8x512xbf16>
    %c0_6 = arith.constant 0 : index
    %c0_7 = arith.constant 0 : index
    %9 = vector.load %arg3[%c0_6, %c0_7] : memref<512x128xbf16, #tpu.memory_space<vmem>>, vector<512x128xbf16>
    %cst_8 = arith.constant dense<0.000000e+00> : vector<8x128xf32>
    %10 = tpu.matmul %8, %9, %cst_8 {dimension_numbers = #tpu.dot_dimension_numbers<[1], [0], [0], [1], [0, 0, 1, 1], [], []>} : vector<8x512xbf16>, vector<512x128xbf16>, vector<8x128xf32> -> vector<8x128xf32>
    %c0_9 = arith.constant 0 : index
    %c0_10 = arith.constant 0 : index
    %11 = vector.load %arg4[%c0_9, %c0_10] : memref<1x128xf32, #tpu.memory_space<vmem>>, vector<1x128xf32>
    %12 = vector.broadcast %11 : vector<1x128xf32> to vector<8x128xf32>
    %13 = arith.addf %10, %12 : vector<8x128xf32>
    %c0_11 = arith.constant 0 : index
    %c0_12 = arith.constant 0 : index
    %14 = vector.load %arg5[%c0_11, %c0_12] : memref<8x128xf32, #tpu.memory_space<vmem>>, vector<8x128xf32>
    tpu.vector_store %arg5[%c0_11, %c0_12], %13 {strides = array<i32>} : memref<8x128xf32, #tpu.memory_space<vmem>>, vector<8x128xf32>,
    return
  }
}

</mosaic_0001>

<llo_original>
// kernel: dddqn_forward_fused.1
$region0: #{dddqn_forward_fused.1}
  #allocation0 [shape = 'u32[]', space=smem, size = 0x4, offset = 0x4, fixed_abs, tag = 'smem constant byte address 0x4 - core index']
  #allocation1 [shape = 'u32[144,128]{1,0:T(1,128)}', space=vmem, size = 0x12000, scoped, tag = 'internal scratch']
  %s0 = inlined_call_operand.vmem [shape: bf16[8,32], index: 0, kind: input, shape index: {}]
  %s1 = inlined_call_operand.hbm [shape: bf16[32,512], index: 1, kind: input, shape index: {}]
  %s2 = inlined_call_operand.vmem [shape: f32[1,512], index: 2, kind: input, shape index: {}]
  %s3 = inlined_call_operand.hbm [shape: bf16[512,128], index: 3, kind: input, shape index: {}]
  %s4 = inlined_call_operand.vmem [shape: f32[1,128], index: 4, kind: input, shape index: {}]
  %s5 = inlined_call_operand.vmem [shape: f32[8,128], index: 5, kind: output, shape index: {}]
  %s6 = sld [smem:[#allocation0]]
  $region38: #{dddqn_forward_fused.1} parent=0
    _
  %s8 = ssub.s32 1, %s6
  %s9 = scalar_select 0, %s8, %s6
  $region1: #{dddqn_forward_fused.1} parent=0
    #allocation2 [shape = 'u8[32768]{0}', space=vmem, size = 0x8000, scoped, tag = 'input window, operand 1, single buffered']
    #allocation3 [shape = 's32[1]{0}', space=sflag, size = 0x4, scoped, tag = 'scoped memory for dddqn_forward_fused.1']
    #allocation4 [shape = 'u8[131072]{0}', space=vmem, size = 0x20000, scoped, tag = 'input window, operand 3, single buffered']
    #allocation5 [shape = 's32[1]{0}', space=sflag, size = 0x4, scoped, tag = 'scoped memory for dddqn_forward_fused.1']
    %10 = vsyncpa [#allocation3], 0
    %11 = vsyncpa [#allocation5], 0
    // Predicated region
    $region2: #{dddqn_forward_fused.1} parent=1 // pred_check
      _
    $region3: #{dddqn_forward_fused.1} parent=1 // pred_check_branch
      %13 = sbr.rel (0) target = $region5
    $region4: #{dddqn_forward_fused.1} parent=1 // pred_region
      _
    $region5: #{dddqn_forward_fused.1} parent=1 // pred_fallthru
      _
    // Predicated region
    $region6: #{dddqn_forward_fused.1} parent=1 // pred_check
      _
    $region7: #{dddqn_forward_fused.1} parent=1 // pred_check_branch
      %15 = sbr.rel (0) target = $region9
    $region8: #{dddqn_forward_fused.1} parent=1 // pred_region
      %s17 = ssub.s32 1024, 1024
      %18 = vsyncadd [#allocation3], %s17
      %s19 = sshll.u32 [#allocation2], 4
      %s20 = int_to_ptr.vmem [resolvable:$true] %s19
      %25 = dma.hbm_to_vmem [thread:$0]  %s1, 1024, %s20, [#allocation3], 256, 256, 16
    $region9: #{dddqn_forward_fused.1} parent=1 // pred_fallthru
      _
    // Predicated region
    $region10: #{dddqn_forward_fused.1} parent=1 // pred_check
      _
    $region11: #{dddqn_forward_fused.1} parent=1 // pred_check_branch
      %27 = sbr.rel (0) target = $region13
    $region12: #{dddqn_forward_fused.1} parent=1 // pred_region
      _
    $region13: #{dddqn_forward_fused.1} parent=1 // pred_fallthru
      _
    // Predicated region
    $region14: #{dddqn_forward_fused.1} parent=1 // pred_check
      _
    $region15: #{dddqn_forward_fused.1} parent=1 // pred_check_branch
      %29 = sbr.rel (0) target = $region17
    $region16: #{dddqn_forward_fused.1} parent=1 // pred_region
      %s31 = ssub.s32 4096, 4096
      %32 = vsyncadd [#allocation5], %s31
      %s33 = sshll.u32 [#allocation4], 4
      %s34 = int_to_ptr.vmem [resolvable:$true] %s33
      %39 = dma.hbm_to_vmem [thread:$0]  %s3, 4096, %s34, [#allocation5], 64, 64, 4
    $region17: #{dddqn_forward_fused.1} parent=1 // pred_fallthru
      _
    // Predicated region
    $region18: #{dddqn_forward_fused.1} parent=1 // pred_check
      _
    $region19: #{dddqn_forward_fused.1} parent=1 // pred_check_branch
      %41 = sbr.rel (0) target = $region21
    $region20: #{dddqn_forward_fused.1} parent=1 // pred_region
      _
    $region21: #{dddqn_forward_fused.1} parent=1 // pred_fallthru
      _
    // Predicated region
    $region22: #{dddqn_forward_fused.1} parent=1 // pred_check
      _
    $region23: #{dddqn_forward_fused.1} parent=1 // pred_check_branch
      %43 = sbr.rel (0) target = $region25
    $region24: #{dddqn_forward_fused.1} parent=1 // pred_region
      %44 = dma.done [#allocation3], 1024
    $region25: #{dddqn_forward_fused.1} parent=1 // pred_fallthru
      _
    // Predicated region
    $region26: #{dddqn_forward_fused.1} parent=1 // pred_check
      _
    $region27: #{dddqn_forward_fused.1} parent=1 // pred_check_branch
      %46 = sbr.rel (0) target = $region29
    $region28: #{dddqn_forward_fused.1} parent=1 // pred_region
      %47 = dma.done [#allocation5], 4096
    $region29: #{dddqn_forward_fused.1} parent=1 // pred_fallthru
      _
    %v49 = vld [vmem:[%s0] sm:$0xf]
    %v50 = vld [vmem:[#allocation2] sm:$0xff]
    %v51 = vld [vmem:[#allocation2 + $0x8] sm:$0xff]
    %v52 = vld [vmem:[#allocation2 + $0x10] sm:$0xff]
    %v53 = vld [vmem:[#allocation2 + $0x18] sm:$0xff]
    %v54 = vld [vmem:[#allocation2 + $0x20] sm:$0xff]
    %v55 = vld [vmem:[#allocation2 + $0x28] sm:$0xff]
    %v56 = vld [vmem:[#allocation2 + $0x30] sm:$0xff]
    %v57 = vld [vmem:[#allocation2 + $0x38] sm:$0xff]
    %v58 = vld [vmem:[%s2] sm:$0xf]
    %v60 = vlaneseq
    %v61 = vshrl.u32 %v60, 7
    %v62 = vsub.s32 0, %v61
    %v63 = vrot.slane %v58, %v62
    %v64 = vlaneseq
    %v65 = vshrl.u32 %v64, 7
    %v66 = vsub.s32 1, %v65
    %v67 = vrot.slane %v58, %v66
    %v68 = vlaneseq
    %v69 = vshrl.u32 %v68, 7
    %v70 = vsub.s32 2, %v69
    %v71 = vrot.slane %v58, %v70
    %v72 = vlaneseq
    %v73 = vshrl.u32 %v72, 7
    %v74 = vsub.s32 3, %v73
    %v75 = vrot.slane %v58, %v74
    %v88 = vunpack.c.l.b16 %v50
    %v89 = vunpack.c.h.b16 %v50
    %v90 = vunpack.c.l.b16 %v51
    %v91 = vunpack.c.h.b16 %v51
    %v92 = vunpack.c.l.b16 %v52
    %v93 = vunpack.c.h.b16 %v52
    %v94 = vunpack.c.l.b16 %v53
    %v95 = vunpack.c.h.b16 %v53
    %v96 = vunpack.c.l.b16 %v54
    %v97 = vunpack.c.h.b16 %v54
    %v98 = vunpack.c.l.b16 %v55
    %v99 = vunpack.c.h.b16 %v55
    %v100 = vunpack.c.l.b16 %v56
    %v101 = vunpack.c.h.b16 %v56
    %v102 = vunpack.c.l.b16 %v57
    %v103 = vunpack.c.h.b16 %v57
    %v104 = vpack.c.b16 %v92, %v88
    %v105 = vpack.c.b16 %v93, %v89
    %v106 = vpack.c.b16 %v94, %v90
    %v107 = vpack.c.b16 %v95, %v91
    %v108 = vpack.c.b16 %v100, %v96
    %v109 = vpack.c.b16 %v101, %v97
    %v110 = vpack.c.b16 %v102, %v98
    %v111 = vpack.c.b16 %v103, %v99
    %vm120 = vcmask 261120
    %v122 = vsel %vm120, %v49, 0
    %124 = vmatprep.subr.bf16.mxu0 0
    %125 = vmatpush1.bf16.msra.mxu0 0
    %126 = vmatprep.subr.bf16.mxu0 0
    %127 = vmatpush1.bf16.msra.mxu0 0
    %128 = vmatprep.subr.bf16.mxu0 0
    %129 = vmatpush1.bf16.msra.mxu0 0
    %130 = vmatprep.subr.bf16.mxu0 0
    %131 = vmatpush1.bf16.msra.mxu0 0
    %132 = vmatprep.subr.bf16.mxu0 0
    %133 = vmatpush1.bf16.msra.mxu0 0
    %134 = vmatprep.subr.bf16.mxu0 0
    %135 = vmatpush1.bf16.msra.mxu0 0
    %136 = vmatprep.subr.bf16.mxu0 %v109
    %137 = vmatpush1.bf16.msra.mxu0 %v108
    %138 = vmatprep.subr.bf16.mxu0 %v105
    %139 = vmatpush1.bf16.msra.mxu0 %v104
    %140 = vmatprep.subr.bf16.mxu0 0
    %141 = vmatpush2.bf16.msra.mxu0 0
    %142 = vmatprep.subr.bf16.mxu0 0
    %143 = vmatpush2.bf16.msra.mxu0 0
    %144 = vmatprep.subr.bf16.mxu0 0
    %145 = vmatpush2.bf16.msra.mxu0 0
    %146 = vmatprep.subr.bf16.mxu0 0
    %147 = vmatpush2.bf16.msra.mxu0 0
    %148 = vmatprep.subr.bf16.mxu0 0
    %149 = vmatpush2.bf16.msra.mxu0 0
    %150 = vmatprep.subr.bf16.mxu0 0
    %151 = vmatpush2.bf16.msra.mxu0 0
    %152 = vmatprep.subr.bf16.mxu0 0
    %153 = vmatpush2.bf16.msra.mxu0 0
    %154 = vmatprep.subr.bf16.mxu0 0
    %155 = vmatpush2.bf16.msra.mxu0 0
    %156 = vmatprep.mubr.bf16.mxu0 0
    %157 = vmatmul.mubr.bf16.gmra.mxu0 %v122
    %v158 = vpop.f32.mrf.mxu0
    %v159 = vadd.f32 %v63, %v158
    %v160 = vpop.f32.mrf.mxu0
    %v161 = vadd.f32 %v67, %v160
    %v162 = vpop.f32.mrf.mxu0
    %v163 = vpop.f32.mrf.mxu0
    %164 = vdwg.mxu0
    %165 = vmatprep.subr.bf16.mxu0 0
    %166 = vmatpush1.bf16.msra.mxu0 0
    %167 = vmatprep.subr.bf16.mxu0 0
    %168 = vmatpush1.bf16.msra.mxu0 0
    %169 = vmatprep.subr.bf16.mxu0 0
    %170 = vmatpush1.bf16.msra.mxu0 0
    %171 = vmatprep.subr.bf16.mxu0 0
    %172 = vmatpush1.bf16.msra.mxu0 0
    %173 = vmatprep.subr.bf16.mxu0 0
    %174 = vmatpush1.bf16.msra.mxu0 0
    %175 = vmatprep.subr.bf16.mxu0 0
    %176 = vmatpush1.bf16.msra.mxu0 0
    %177 = vmatprep.subr.bf16.mxu0 %v111
    %178 = vmatpush1.bf16.msra.mxu0 %v110
    %179 = vmatprep.subr.bf16.mxu0 %v107
    %180 = vmatpush1.bf16.msra.mxu0 %v106
    %181 = vmatprep.subr.bf16.mxu0 0
    %182 = vmatpush2.bf16.msra.mxu0 0
    %183 = vmatprep.subr.bf16.mxu0 0
    %184 = vmatpush2.bf16.msra.mxu0 0
    %185 = vmatprep.subr.bf16.mxu0 0
    %186 = vmatpush2.bf16.msra.mxu0 0
    %187 = vmatprep.subr.bf16.mxu0 0
    %188 = vmatpush2.bf16.msra.mxu0 0
    %189 = vmatprep.subr.bf16.mxu0 0
    %190 = vmatpush2.bf16.msra.mxu0 0
    %191 = vmatprep.subr.bf16.mxu0 0
    %192 = vmatpush2.bf16.msra.mxu0 0
    %193 = vmatprep.subr.bf16.mxu0 0
    %194 = vmatpush2.bf16.msra.mxu0 0
    %195 = vmatprep.subr.bf16.mxu0 0
    %196 = vmatpush2.bf16.msra.mxu0 0
    %197 = vmatprep.mubr.bf16.mxu0 0
    %198 = vmatmul.mubr.bf16.gmra.mxu0 %v122
    %v199 = vpop.f32.mrf.mxu0
    %v200 = vadd.f32 %v71, %v199
    %v201 = vpop.f32.mrf.mxu0
    %v202 = vadd.f32 %v75, %v201
    %v203 = vpop.f32.mrf.mxu0
    %v204 = vpop.f32.mrf.mxu0
    %205 = vdwg.mxu0
    %v206 = vmax.f32 %v159, 0.0
    %v207 = vmax.f32 %v161, 0.0
    %v208 = vmax.f32 %v200, 0.0
    %v209 = vmax.f32 %v202, 0.0
    %v210 = vpack.c.bf16 %v206, %v206
    %v211 = vpack.c.bf16 %v207, %v207
    %v212 = vpack.c.bf16 %v208, %v208
    %v213 = vpack.c.bf16 %v209, %v209
    %v214 = vld [vmem:[#allocation4] sm:$0xf]
    %v215 = vld [vmem:[#allocation4 + $0x4] sm:$0xf]
    %v216 = vld [vmem:[#allocation4 + $0x8] sm:$0xf]
    %v217 = vld [vmem:[#allocation4 + $0xc] sm:$0xf]
    %v218 = vld [vmem:[#allocation4 + $0x10] sm:$0xf]
    %v219 = vld [vmem:[#allocation4 + $0x14] sm:$0xf]
    %v220 = vld [vmem:[#allocation4 + $0x18] sm:$0xf]
    %v221 = vld [vmem:[#allocation4 + $0x1c] sm:$0xf]
    %v222 = vld [vmem:[#allocation4 + $0x20] sm:$0xf]
    %v223 = vld [vmem:[#allocation4 + $0x24] sm:$0xf]
    %v224 = vld [vmem:[#allocation4 + $0x28] sm:$0xf]
    %v225 = vld [vmem:[#allocation4 + $0x2c] sm:$0xf]
    %v226 = vld [vmem:[#allocation4 + $0x30] sm:$0xf]
    %v227 = vld [vmem:[#allocation4 + $0x34] sm:$0xf]
    %v228 = vld [vmem:[#allocation4 + $0x38] sm:$0xf]
    %v229 = vld [vmem:[#allocation4 + $0x3c] sm:$0xf]
    %v230 = vld [vmem:[#allocation4 + $0x40] sm:$0xf]
    %v231 = vld [vmem:[#allocation4 + $0x44] sm:$0xf]
    %v232 = vld [vmem:[#allocation4 + $0x48] sm:$0xf]
    %v233 = vld [vmem:[#allocation4 + $0x4c] sm:$0xf]
    %v234 = vld [vmem:[#allocation4 + $0x50] sm:$0xf]
    %v235 = vld [vmem:[#allocation4 + $0x54] sm:$0xf]
    %v236 = vld [vmem:[#allocation4 + $0x58] sm:$0xf]
    %v237 = vld [vmem:[#allocation4 + $0x5c] sm:$0xf]
    %v238 = vld [vmem:[#allocation4 + $0x60] sm:$0xf]
    %v239 = vld [vmem:[#allocation4 + $0x64] sm:$0xf]
    %v240 = vld [vmem:[#allocation4 + $0x68] sm:$0xf]
    %v241 = vld [vmem:[#allocation4 + $0x6c] sm:$0xf]
    %v242 = vld [vmem:[#allocation4 + $0x70] sm:$0xf]
    %v243 = vld [vmem:[#allocation4 + $0x74] sm:$0xf]
    %v244 = vld [vmem:[#allocation4 + $0x78] sm:$0xf]
    %v245 = vld [vmem:[#allocation4 + $0x7c] sm:$0xf]
    %v246 = vld [vmem:[#allocation4 + $0x80] sm:$0xf]
    %v247 = vld [vmem:[#allocation4 + $0x84] sm:$0xf]
    %v248 = vld [vmem:[#allocation4 + $0x88] sm:$0xf]
    %v249 = vld [vmem:[#allocation4 + $0x8c] sm:$0xf]
    %v250 = vld [vmem:[#allocation4 + $0x90] sm:$0xf]
    %v251 = vld [vmem:[#allocation4 + $0x94] sm:$0xf]
    %v252 = vld [vmem:[#allocation4 + $0x98] sm:$0xf]
    %v253 = vld [vmem:[#allocation4 + $0x9c] sm:$0xf]
    %v254 = vld [vmem:[#allocation4 + $0xa0] sm:$0xf]
    %v255 = vld [vmem:[#allocation4 + $0xa4] sm:$0xf]
    %v256 = vld [vmem:[#allocation4 + $0xa8] sm:$0xf]
    %v257 = vld [vmem:[#allocation4 + $0xac] sm:$0xf]
    %v258 = vld [vmem:[#allocation4 + $0xb0] sm:$0xf]
    %v259 = vld [vmem:[#allocation4 + $0xb4] sm:$0xf]
    %v260 = vld [vmem:[#allocation4 + $0xb8] sm:$0xf]
    %v261 = vld [vmem:[#allocation4 + $0xbc] sm:$0xf]
    %v262 = vld [vmem:[#allocation4 + $0xc0] sm:$0xf]
    %v263 = vld [vmem:[#allocation4 + $0xc4] sm:$0xf]
    %v264 = vld [vmem:[#allocation4 + $0xc8] sm:$0xf]
    %v265 = vld [vmem:[#allocation4 + $0xcc] sm:$0xf]
    %v266 = vld [vmem:[#allocation4 + $0xd0] sm:$0xf]
    %v267 = vld [vmem:[#allocation4 + $0xd4] sm:$0xf]
    %v268 = vld [vmem:[#allocation4 + $0xd8] sm:$0xf]
    %v269 = vld [vmem:[#allocation4 + $0xdc] sm:$0xf]
    %v270 = vld [vmem:[#allocation4 + $0xe0] sm:$0xf]
    %v271 = vld [vmem:[#allocation4 + $0xe4] sm:$0xf]
    %v272 = vld [vmem:[#allocation4 + $0xe8] sm:$0xf]
    %v273 = vld [vmem:[#allocation4 + $0xec] sm:$0xf]
    %v274 = vld [vmem:[#allocation4 + $0xf0] sm:$0xf]
    %v275 = vld [vmem:[#allocation4 + $0xf4] sm:$0xf]
    %v276 = vld [vmem:[#allocation4 + $0xf8] sm:$0xf]
    %v277 = vld [vmem:[#allocation4 + $0xfc] sm:$0xf]
    %v278 = vld [vmem:[%s4] sm:$0x1]
    %v280 = vlaneseq
    %v281 = vshrl.u32 %v280, 7
    %v282 = vsub.s32 0, %v281
    %v283 = vrot.slane %v278, %v282
    %v349 = vunpack.c.l.b16 %v214
    %v350 = vunpack.c.l.b16 %v215
    %v351 = vunpack.c.l.b16 %v216
    %v352 = vunpack.c.l.b16 %v217
    %v353 = vunpack.c.l.b16 %v218
    %v354 = vunpack.c.l.b16 %v219
    %v355 = vunpack.c.l.b16 %v220
    %v356 = vunpack.c.l.b16 %v221
    %v357 = vunpack.c.l.b16 %v222
    %v358 = vunpack.c.l.b16 %v223
    %v359 = vunpack.c.l.b16 %v224
    %v360 = vunpack.c.l.b16 %v225
    %v361 = vunpack.c.l.b16 %v226
    %v362 = vunpack.c.l.b16 %v227
    %v363 = vunpack.c.l.b16 %v228
    %v364 = vunpack.c.l.b16 %v229
    %v365 = vunpack.c.l.b16 %v230
    %v366 = vunpack.c.l.b16 %v231
    %v367 = vunpack.c.l.b16 %v232
    %v368 = vunpack.c.l.b16 %v233
    %v369 = vunpack.c.l.b16 %v234
    %v370 = vunpack.c.l.b16 %v235
    %v371 = vunpack.c.l.b16 %v236
    %v372 = vunpack.c.l.b16 %v237
    %v373 = vunpack.c.l.b16 %v238
    %v374 = vunpack.c.l.b16 %v239
    %v375 = vunpack.c.l.b16 %v240
    %v376 = vunpack.c.l.b16 %v241
    %v377 = vunpack.c.l.b16 %v242
    %v378 = vunpack.c.l.b16 %v243
    %v379 = vunpack.c.l.b16 %v244
    %v380 = vunpack.c.l.b16 %v245
    %v381 = vunpack.c.l.b16 %v246
    %v382 = vunpack.c.l.b16 %v247
    %v383 = vunpack.c.l.b16 %v248
    %v384 = vunpack.c.l.b16 %v249
    %v385 = vunpack.c.l.b16 %v250
    %v386 = vunpack.c.l.b16 %v251
    %v387 = vunpack.c.l.b16 %v252
    %v388 = vunpack.c.l.b16 %v253
    %v389 = vunpack.c.l.b16 %v254
    %v390 = vunpack.c.l.b16 %v255
    %v391 = vunpack.c.l.b16 %v256
    %v392 = vunpack.c.l.b16 %v257
    %v393 = vunpack.c.l.b16 %v258
    %v394 = vunpack.c.l.b16 %v259
    %v395 = vunpack.c.l.b16 %v260
    %v396 = vunpack.c.l.b16 %v261
    %v397 = vunpack.c.l.b16 %v262
    %v398 = vunpack.c.l.b16 %v263
    %v399 = vunpack.c.l.b16 %v264
    %v400 = vunpack.c.l.b16 %v265
    %v401 = vunpack.c.l.b16 %v266
    %v402 = vunpack.c.l.b16 %v267
    %v403 = vunpack.c.l.b16 %v268
    %v404 = vunpack.c.l.b16 %v269
    %v405 = vunpack.c.l.b16 %v270
    %v406 = vunpack.c.l.b16 %v271
    %v407 = vunpack.c.l.b16 %v272
    %v408 = vunpack.c.l.b16 %v273
    %v409 = vunpack.c.l.b16 %v274
    %v410 = vunpack.c.l.b16 %v275
    %v411 = vunpack.c.l.b16 %v276
    %v412 = vunpack.c.l.b16 %v277
    %v413 = vpack.c.b16 %v350, %v349
    %v414 = vpack.c.b16 %v352, %v351
    %v415 = vpack.c.b16 %v354, %v353
    %v416 = vpack.c.b16 %v356, %v355
    %v417 = vpack.c.b16 %v358, %v357
    %v418 = vpack.c.b16 %v360, %v359
    %v419 = vpack.c.b16 %v362, %v361
    %v420 = vpack.c.b16 %v364, %v363
    %v421 = vpack.c.b16 %v366, %v365
    %v422 = vpack.c.b16 %v368, %v367
    %v423 = vpack.c.b16 %v370, %v369
    %v424 = vpack.c.b16 %v372, %v371
    %v425 = vpack.c.b16 %v374, %v373
    %v426 = vpack.c.b16 %v376, %v375
    %v427 = vpack.c.b16 %v378, %v377
    %v428 = vpack.c.b16 %v380, %v379
    %v429 = vpack.c.b16 %v382, %v381
    %v430 = vpack.c.b16 %v384, %v383
    %v431 = vpack.c.b16 %v386, %v385
    %v432 = vpack.c.b16 %v388, %v387
    %v433 = vpack.c.b16 %v390, %v389
    %v434 = vpack.c.b16 %v392, %v391
    %v435 = vpack.c.b16 %v394, %v393
    %v436 = vpack.c.b16 %v396, %v395
    %v437 = vpack.c.b16 %v398, %v397
    %v438 = vpack.c.b16 %v400, %v399
    %v439 = vpack.c.b16 %v402, %v401
    %v440 = vpack.c.b16 %v404, %v403
    %v441 = vpack.c.b16 %v406, %v405
    %v442 = vpack.c.b16 %v408, %v407
    %v443 = vpack.c.b16 %v410, %v409
    %v444 = vpack.c.b16 %v412, %v411
    %477 = vmatprep.subr.bf16.mxu0 0
    %478 = vmatpush1.bf16.msra.mxu0 %v420
    %479 = vmatprep.subr.bf16.mxu0 0
    %480 = vmatpush1.bf16.msra.mxu0 %v419
    %481 = vmatprep.subr.bf16.mxu0 0
    %482 = vmatpush1.bf16.msra.mxu0 %v418
    %483 = vmatprep.subr.bf16.mxu0 0
    %484 = vmatpush1.bf16.msra.mxu0 %v417
    %485 = vmatprep.subr.bf16.mxu0 0
    %486 = vmatpush1.bf16.msra.mxu0 %v416
    %487 = vmatprep.subr.bf16.mxu0 0
    %488 = vmatpush1.bf16.msra.mxu0 %v415
    %489 = vmatprep.subr.bf16.mxu0 0
    %490 = vmatpush1.bf16.msra.mxu0 %v414
    %491 = vmatprep.subr.bf16.mxu0 0
    %492 = vmatpush1.bf16.msra.mxu0 %v413
    %493 = vmatprep.subr.bf16.mxu0 0
    %494 = vmatpush2.bf16.msra.mxu0 %v428
    %495 = vmatprep.subr.bf16.mxu0 0
    %496 = vmatpush2.bf16.msra.mxu0 %v427
    %497 = vmatprep.subr.bf16.mxu0 0
    %498 = vmatpush2.bf16.msra.mxu0 %v426
    %499 = vmatprep.subr.bf16.mxu0 0
    %500 = vmatpush2.bf16.msra.mxu0 %v425
    %501 = vmatprep.subr.bf16.mxu0 0
    %502 = vmatpush2.bf16.msra.mxu0 %v424
    %503 = vmatprep.subr.bf16.mxu0 0
    %504 = vmatpush2.bf16.msra.mxu0 %v423
    %505 = vmatprep.subr.bf16.mxu0 0
    %506 = vmatpush2.bf16.msra.mxu0 %v422
    %507 = vmatprep.subr.bf16.mxu0 0
    %508 = vmatpush2.bf16.msra.mxu0 %v421
    %509 = vmatprep.mubr.bf16.mxu0 %v211
    %510 = vmatmul.mubr.bf16.gmra.mxu0 %v210
    %v511 = vpop.f32.mrf.mxu0
    %v512 = vadd.f32 %v283, %v511
    %v513 = vpop.f32.mrf.mxu0
    %v514 = vpop.f32.mrf.mxu0
    %v515 = vpop.f32.mrf.mxu0
    %516 = vdwg.mxu0
    %517 = vmatprep.subr.bf16.mxu0 0
    %518 = vmatpush1.bf16.msra.mxu0 %v436
    %519 = vmatprep.subr.bf16.mxu0 0
    %520 = vmatpush1.bf16.msra.mxu0 %v435
    %521 = vmatprep.subr.bf16.mxu0 0
    %522 = vmatpush1.bf16.msra.mxu0 %v434
    %523 = vmatprep.subr.bf16.mxu0 0
    %524 = vmatpush1.bf16.msra.mxu0 %v433
    %525 = vmatprep.subr.bf16.mxu0 0
    %526 = vmatpush1.bf16.msra.mxu0 %v432
    %527 = vmatprep.subr.bf16.mxu0 0
    %528 = vmatpush1.bf16.msra.mxu0 %v431
    %529 = vmatprep.subr.bf16.mxu0 0
    %530 = vmatpush1.bf16.msra.mxu0 %v430
    %531 = vmatprep.subr.bf16.mxu0 0
    %532 = vmatpush1.bf16.msra.mxu0 %v429
    %533 = vmatprep.subr.bf16.mxu0 0
    %534 = vmatpush2.bf16.msra.mxu0 %v444
    %535 = vmatprep.subr.bf16.mxu0 0
    %536 = vmatpush2.bf16.msra.mxu0 %v443
    %537 = vmatprep.subr.bf16.mxu0 0
    %538 = vmatpush2.bf16.msra.mxu0 %v442
    %539 = vmatprep.subr.bf16.mxu0 0
    %540 = vmatpush2.bf16.msra.mxu0 %v441
    %541 = vmatprep.subr.bf16.mxu0 0
    %542 = vmatpush2.bf16.msra.mxu0 %v440
    %543 = vmatprep.subr.bf16.mxu0 0
    %544 = vmatpush2.bf16.msra.mxu0 %v439
    %545 = vmatprep.subr.bf16.mxu0 0
    %546 = vmatpush2.bf16.msra.mxu0 %v438
    %547 = vmatprep.subr.bf16.mxu0 0
    %548 = vmatpush2.bf16.msra.mxu0 %v437
    %549 = vmatprep.mubr.bf16.mxu0 %v213
    %550 = vmatmul.mubr.bf16.gmra.mxu0 %v212
    %v551 = vpop.f32.mrf.mxu0
    %v552 = vadd.f32 %v512, %v551
    %v553 = vpop.f32.mrf.mxu0
    %v554 = vpop.f32.mrf.mxu0
    %v555 = vpop.f32.mrf.mxu0
    %556 = vdwg.mxu0
    %557 = vst [vmem:[%s5] sm:$0xff] %v552
    // Predicated region
    $region30: #{dddqn_forward_fused.1} parent=1 // pred_check
      _
    $region31: #{dddqn_forward_fused.1} parent=1 // pred_check_branch
      %559 = sbr.rel (0) target = $region33
    $region32: #{dddqn_forward_fused.1} parent=1 // pred_region
      _
    $region33: #{dddqn_forward_fused.1} parent=1 // pred_fallthru
      _
    // Predicated region
    $region34: #{dddqn_forward_fused.1} parent=1 // pred_check
      _
    $region35: #{dddqn_forward_fused.1} parent=1 // pred_check_branch
      %561 = sbr.rel (0) target = $region37
    $region36: #{dddqn_forward_fused.1} parent=1 // pred_region
      _
    $region37: #{dddqn_forward_fused.1} parent=1 // pred_fallthru
      _
    %562 = vsyncpa [#allocation3], 1
    %563 = vsyncpa [#allocation5], 1

</llo_original>
